<compile_context>
chip_gen: v7x
topology: tpu7x:2x2x1
jax: 0.10.0
libtpu: 0.0.40
codegen_flags: <defaults>
</compile_context>

<pallas_src>
import jax
import jax.numpy as jnp
from jax import lax
from jax.experimental import pallas as pl
from jax.experimental.pallas import tpu as pltpu

P5 = 2  # padding of the k=5 pool (the only pool actually executed, cascaded)


def _silu(y):
    # y * sigmoid(y); the divide goes to the EUP slot instead of extra VALU work.
    return y * pl.reciprocal(1.0 + jnp.exp(-y), approx=False)


# ----------------------------------------------------------------------------
# Kernel 1: cv1 = 1x1 conv (channel matmul) + folded BN + SiLU, tiled over M.
# ----------------------------------------------------------------------------
def _conv1x1_bn_silu_kernel(x_ref, w_ref, scale_ref, bias_ref, o_ref):
    # x_ref: (TM, Cin), w_ref: (Cin, Cout), scale/bias: (1, Cout)
    y = jnp.dot(x_ref[...], w_ref[...], preferred_element_type=jnp.float32)
    y = y * scale_ref[...] + bias_ref[...]
    o_ref[...] = _silu(y).astype(o_ref.dtype)


def _pick_row_tile(m, target=1024):
    """Largest multiple-of-8 divisor of m that is <= target and gives >= 2
    tiles when m is large enough to be worth pipelining."""
    if m <= 256:
        return m
    cand = min(target, m // 2)
    cand = max(8, (cand // 8) * 8)
    while cand >= 8:
        if m % cand == 0:
            return cand
        cand -= 8
    return m  # fallback: single full block (still valid, just unpipelined)


def conv1x1_bn_silu(x2d, w, scale, bias, out_dtype=jnp.float32):
    m, cin = x2d.shape
    cout = w.shape[1]
    tm = _pick_row_tile(m)
    # 2 x (TM*Cin + TM*Cout) * 4B + weights stays well under the 32 MiB scoped
    # VMEM default on v6e/v7x for TM <= 1024 and SPP-sized channel counts.
    return pl.pallas_call(
        _conv1x1_bn_silu_kernel,
        out_shape=jax.ShapeDtypeStruct((m, cout), out_dtype),
        grid=(pl.cdiv(m, tm),),
        in_specs=[
            pl.BlockSpec((tm, cin), lambda i: (i, 0)),
            pl.BlockSpec((cin, cout), lambda i: (0, 0)),  # weight stays resident
            pl.BlockSpec((1, cout), lambda i: (0, 0)),
            pl.BlockSpec((1, cout), lambda i: (0, 0)),
        ],
        out_specs=pl.BlockSpec((tm, cout), lambda i: (i, 0)),
        compiler_params=pltpu.CompilerParams(
            dimension_semantics=("parallel",)),
    )(x2d, w, scale, bias)


# ----------------------------------------------------------------------------
# Kernel 2: fused SPPF cascade (pool5 x3 == pools 5/9/13) + concat-free cv2.
# ----------------------------------------------------------------------------
def _spp_pool_cv2_kernel(y_ref, w2_ref, scale_ref, bias_ref, o_ref, pad_ref):
    # y_ref:   (1, H, W, C)   NHWC block for one batch element (output of cv1)
    # w2_ref:  (4*C, C2); scale_ref/bias_ref: (1, C2)
    # o_ref:   (1, H, W, C2)
    # pad_ref: (1, H+2*P5, W+2*P5, C) scratch with -inf borders
    _, H, W, C = y_ref.shape
    c2 = o_ref.shape[-1]
    dt = y_ref.dtype
    hp, wp = H + 2 * P5, W + 2 * P5

    # -inf border strips only (interior is overwritten by every pool5 call).
    # Written unconditionally so the kernel stays correct if the "parallel"
    # batch axis is sharded across TensorCores (each core has its own scratch).
    pad_ref[:, 0:P5, :, :] = jnp.full((1, P5, wp, C), -jnp.inf, dt)
    pad_ref[:, P5 + H:hp, :, :] = jnp.full((1, P5, wp, C), -jnp.inf, dt)
    pad_ref[:, :, 0:P5, :] = jnp.full((1, hp, P5, C), -jnp.inf, dt)
    pad_ref[:, :, P5 + W:wp, :] = jnp.full((1, hp, P5, C), -jnp.inf, dt)

    def pool5(cur):
        # cur: (1, H, W, C) register array -> MaxPool2d(k=5, stride=1, pad=2).
        pad_ref[:, P5:P5 + H, P5:P5 + W, :] = cur
        # W-axis (sublane) max: 5 sublane-offset loads of the padded scratch.
        cp = pad_ref[:, :, 0:W, :]
        for d in range(1, 2 * P5 + 1):
            cp = jnp.maximum(cp, pad_ref[:, :, d:d + W, :])
        # H-axis max: pure leading-dim register slicing (address offsets only).
        out = cp[:, 0:H, :, :]
        for d in range(1, 2 * P5 + 1):
            out = jnp.maximum(out, cp[:, d:d + H, :, :])
        return out

    y = y_ref[...]
    m5 = pool5(y)    # == MaxPool2d(5, 1, 2)(y)
    m9 = pool5(m5)   # == MaxPool2d(9, 1, 4)(y)   (SPPF cascade, bit-identical)
    m13 = pool5(m9)  # == MaxPool2d(13, 1, 6)(y)

    # cv2 with the channel concat fused away: split w2 row-wise into 4 blocks.
    def flat(a):
        return a.reshape(H * W, C)

    acc = jnp.dot(flat(y), w2_ref[0:C, :], preferred_element_type=jnp.float32)
    acc = acc + jnp.dot(flat(m5), w2_ref[C:2 * C, :],
                        preferred_element_type=jnp.float32)
    acc = acc + jnp.dot(flat(m9), w2_ref[2 * C:3 * C, :],
                        preferred_element_type=jnp.float32)
    acc = acc + jnp.dot(flat(m13), w2_ref[3 * C:4 * C, :],
                        preferred_element_type=jnp.float32)
    z = acc * scale_ref[...] + bias_ref[...]
    o_ref[...] = _silu(z).reshape(1, H, W, c2).astype(o_ref.dtype)


def spp_pool_cv2(y_nhwc, w2, scale2, bias2, out_dtype=jnp.float32):
    n, h, w, c = y_nhwc.shape
    c2 = w2.shape[1]
    return pl.pallas_call(
        _spp_pool_cv2_kernel,
        out_shape=jax.ShapeDtypeStruct((n, h, w, c2), out_dtype),
        grid=(n,),
        in_specs=[
            pl.BlockSpec((1, h, w, c), lambda b: (b, 0, 0, 0)),
            pl.BlockSpec((4 * c, c2), lambda b: (0, 0)),   # weight resident
            pl.BlockSpec((1, c2), lambda b: (0, 0)),
            pl.BlockSpec((1, c2), lambda b: (0, 0)),
        ],
        out_specs=pl.BlockSpec((1, h, w, c2), lambda b: (b, 0, 0, 0)),
        scratch_shapes=[
            pltpu.VMEM((1, h + 2 * P5, w + 2 * P5, c), y_nhwc.dtype),
        ],
        compiler_params=pltpu.CompilerParams(
            dimension_semantics=("parallel",)),
    )(y_nhwc, w2, scale2, bias2)


# ----------------------------------------------------------------------------
# SPP module: cv1 -> [identity, pool5, pool9, pool13] -> (fused concat) -> cv2
# ----------------------------------------------------------------------------
def spp_forward(x_nchw, params):
    n, c1, h, w = x_nchw.shape
    c_ = params["w1"].shape[1]

    # NCHW -> NHWC once at the module boundary.
    x_nhwc = jnp.transpose(x_nchw, (0, 2, 3, 1))
    x2d = x_nhwc.reshape(n * h * w, c1)

    # cv1 (tiled, pipelined matmul)
    y2d = conv1x1_bn_silu(x2d, params["w1"], params["scale1"], params["bias1"])
    y_nhwc = y2d.reshape(n, h, w, c_)

    # SPPF cascade pools + concat-free cv2, fused in one kernel
    z_nhwc = spp_pool_cv2(y_nhwc, params["w2"], params["scale2"],
                          params["bias2"])

    # back to the module's NCHW interface
    return jnp.transpose(z_nhwc, (0, 3, 1, 2))


# ----------------------------------------------------------------------------
# Deterministic parameter construction (Conv2d 1x1 weight + folded BatchNorm)
# ----------------------------------------------------------------------------
def make_conv_bn_params(key, cin, cout, eps=1e-5):
    k_w, k_g, k_b, k_m, k_v = jax.random.split(key, 5)
    w = jax.random.normal(k_w, (cin, cout), jnp.float32) * (1.0 / jnp.sqrt(cin))
    gamma = 1.0 + 0.1 * jax.random.normal(k_g, (cout,), jnp.float32)
    beta = 0.1 * jax.random.normal(k_b, (cout,), jnp.float32)
    mean = 0.1 * jax.random.normal(k_m, (cout,), jnp.float32)
    var = jnp.abs(jax.random.normal(k_v, (cout,), jnp.float32)) + 0.5
    scale = gamma / jnp.sqrt(var + eps)
    bias = beta - mean * scale
    return w, scale.reshape(1, cout), bias.reshape(1, cout)


# ----------------------------------------------------------------------------
# Pure-JAX reference (correctness check)
# ----------------------------------------------------------------------------
def _ref_conv(x2d, w, scale, bias):
    y = x2d @ w * scale + bias
    return y * (1.0 / (1.0 + jnp.exp(-y)))


def _ref_maxpool(x, k):
    p = k // 2
    xp = jnp.pad(x, ((0, 0), (0, 0), (p, p), (p, p)), constant_values=-jnp.inf)
    return lax.reduce_window(xp, -jnp.inf, lax.max, (1, 1, k, k),
                             (1, 1, 1, 1), "VALID")


def spp_reference(x_nchw, params):
    n, c1, h, w = x_nchw.shape
    c_ = params["w1"].shape[1]
    c2 = params["w2"].shape[1]
    x2d = jnp.transpose(x_nchw, (0, 2, 3, 1)).reshape(n * h * w, c1)
    y = jnp.transpose(_ref_conv(x2d, params["w1"], params["scale1"],
                                params["bias1"]).reshape(n, h, w, c_),
                      (0, 3, 1, 2))
    cat = jnp.concatenate([y] + [_ref_maxpool(y, k) for k in (5, 9, 13)],
                          axis=1)
    cat2d = jnp.transpose(cat, (0, 2, 3, 1)).reshape(n * h * w, 4 * c_)
    z = _ref_conv(cat2d, params["w2"], params["scale2"], params["bias2"])
    return jnp.transpose(z.reshape(n, h, w, c2), (0, 3, 1, 2))


if __name__ == "__main__":
    N, C1, H, W = 2, 16, 16, 16
    C2 = 16
    C_ = C1 // 2

    key = jax.random.PRNGKey(0)
    kx, k1, k2 = jax.random.split(key, 3)
    x = jax.random.normal(kx, (N, C1, H, W), jnp.float32)

    w1, s1, b1 = make_conv_bn_params(k1, C1, C_)
    w2, s2, b2 = make_conv_bn_params(k2, C_ * 4, C2)
    params = {"w1": w1, "scale1": s1, "bias1": b1,
              "w2": w2, "scale2": s2, "bias2": b2}

    out = jax.block_until_ready(spp_forward(x, params))
    ref = jax.block_until_ready(spp_reference(x, params))

    assert out.shape == (N, C2, H, W), out.shape
    err = float(jnp.max(jnp.abs(out - ref)))
    assert jnp.allclose(out, ref, rtol=1e-3, atol=1e-3), err
    print("KERNEL_OK")
</pallas_src>

<mosaic_0001>
module attributes {stable_mosaic.version = 11 : i64} {
  func.func @_conv1x1_bn_silu_kernel(%arg0: i32, %arg1: memref<256x16xf32, #tpu.memory_space<vmem>>, %arg2: memref<16x8xf32, #tpu.memory_space<vmem>>, %arg3: memref<1x8xf32, #tpu.memory_space<vmem>>, %arg4: memref<1x8xf32, #tpu.memory_space<vmem>>, %arg5: memref<256x8xf32, #tpu.memory_space<vmem>>) attributes {dimension_semantics = [#tpu.dimension_semantics<parallel>], iteration_bounds = array<i64: 2>, scalar_prefetch = 0 : i64, scratch_operands = 0 : i64, tpu.core_type = #tpu.core_type<tc>, window_params = [{transform_indices = @transform_0, window_bounds = array<i64: 256, 16>}, {pipeline_mode = #tpu.pipeline_mode<synchronous>, transform_indices = @transform_1, window_bounds = array<i64: 16, 8>}, {pipeline_mode = #tpu.pipeline_mode<synchronous>, transform_indices = @transform_2, window_bounds = array<i64: 1, 8>}, {pipeline_mode = #tpu.pipeline_mode<synchronous>, transform_indices = @transform_3, window_bounds = array<i64: 1, 8>}, {transform_indices = @transform_4, window_bounds = array<i64: 256, 8>}]} {
    %c0 = arith.constant 0 : index
    %c0_0 = arith.constant 0 : index
    %0 = vector.load %arg1[%c0, %c0_0] : memref<256x16xf32, #tpu.memory_space<vmem>>, vector<256x16xf32>
    %c0_1 = arith.constant 0 : index
    %c0_2 = arith.constant 0 : index
    %1 = vector.load %arg2[%c0_1, %c0_2] : memref<16x8xf32, #tpu.memory_space<vmem>>, vector<16x8xf32>
    %cst = arith.constant dense<0.000000e+00> : vector<256x8xf32>
    %2 = tpu.matmul %0, %1, %cst {dimension_numbers = #tpu.dot_dimension_numbers<[1], [0], [0], [1], [0, 0, 1, 1], [], []>} : vector<256x16xf32>, vector<16x8xf32>, vector<256x8xf32> -> vector<256x8xf32>
    %c0_3 = arith.constant 0 : index
    %c0_4 = arith.constant 0 : index
    %3 = vector.load %arg3[%c0_3, %c0_4] : memref<1x8xf32, #tpu.memory_space<vmem>>, vector<1x8xf32>
    %4 = vector.broadcast %3 : vector<1x8xf32> to vector<256x8xf32>
    %5 = arith.mulf %2, %4 : vector<256x8xf32>
    %c0_5 = arith.constant 0 : index
    %c0_6 = arith.constant 0 : index
    %6 = vector.load %arg4[%c0_5, %c0_6] : memref<1x8xf32, #tpu.memory_space<vmem>>, vector<1x8xf32>
    %7 = vector.broadcast %6 : vector<1x8xf32> to vector<256x8xf32>
    %8 = arith.addf %5, %7 : vector<256x8xf32>
    %cst_7 = arith.constant 0.000000e+00 : f32
    %9 = vector.broadcast %cst_7 : f32 to vector<256x8xf32>
    %10 = arith.subf %9, %8 : vector<256x8xf32>
    %11 = math.exp %10 : vector<256x8xf32>
    %cst_8 = arith.constant 1.000000e+00 : f32
    %12 = vector.broadcast %cst_8 : f32 to vector<256x8xf32>
    %13 = arith.addf %12, %11 : vector<256x8xf32>
    %14 = tpu.reciprocal %13 : vector<256x8xf32> -> vector<256x8xf32>
    %15 = arith.mulf %8, %14 : vector<256x8xf32>
    %c0_9 = arith.constant 0 : index
    %c0_10 = arith.constant 0 : index
    %16 = vector.load %arg5[%c0_9, %c0_10] : memref<256x8xf32, #tpu.memory_space<vmem>>, vector<256x8xf32>
    tpu.vector_store %arg5[%c0_9, %c0_10], %15 {strides = array<i32>} : memref<256x8xf32, #tpu.memory_space<vmem>>, vector<256x8xf32>,
    return
  }
  func.func @transform_0(%arg0: i32) -> (i32, i32) {
    %c0_i32 = arith.constant 0 : i32
    %c0_i32_0 = arith.constant 0 : i32
    return %arg0, %c0_i32 : i32, i32
  }
  func.func @transform_1(%arg0: i32) -> (i32, i32) {
    %c0_i32 = arith.constant 0 : i32
    %c0_i32_0 = arith.constant 0 : i32
    %c0_i32_1 = arith.constant 0 : i32
    return %c0_i32, %c0_i32_0 : i32, i32
  }
  func.func @transform_2(%arg0: i32) -> (i32, i32) {
    %c0_i32 = arith.constant 0 : i32
    %c0_i32_0 = arith.constant 0 : i32
    %c0_i32_1 = arith.constant 0 : i32
    return %c0_i32, %c0_i32_0 : i32, i32
  }
  func.func @transform_3(%arg0: i32) -> (i32, i32) {
    %c0_i32 = arith.constant 0 : i32
    %c0_i32_0 = arith.constant 0 : i32
    %c0_i32_1 = arith.constant 0 : i32
    return %c0_i32, %c0_i32_0 : i32, i32
  }
  func.func @transform_4(%arg0: i32) -> (i32, i32) {
    %c0_i32 = arith.constant 0 : i32
    %c0_i32_0 = arith.constant 0 : i32
    return %arg0, %c0_i32 : i32, i32
  }
}

</mosaic_0001>

<llo_original>
// kernel: tpu_custom_call.1
$region0: #{tpu_custom_call.1}
  #allocation0 [shape = 'u32[]', space=smem, size = 0x4, offset = 0x4, fixed_abs, tag = 'smem constant byte address 0x4 - core index']
  #allocation1 [shape = 'u32[144,128]{1,0:T(1,128)}', space=vmem, size = 0x12000, scoped, tag = 'internal scratch']
  %s0 = inlined_call_operand.vmem [shape: f32[512,16], index: 0, kind: input, shape index: {}]
  %s1 = inlined_call_operand.vmem [shape: f32[16,8], index: 1, kind: input, shape index: {}]
  %s2 = inlined_call_operand.vmem [shape: f32[1,8], index: 2, kind: input, shape index: {}]
  %s3 = inlined_call_operand.vmem [shape: f32[1,8], index: 3, kind: input, shape index: {}]
  %s4 = inlined_call_operand.vmem [shape: f32[512,8], index: 4, kind: output, shape index: {}]
  %s5 = sld [smem:[#allocation0]]
  $region49: #{tpu_custom_call.1} parent=0
    _
  %s7 = ssub.s32 1, %s5
  %s8 = scalar_select 0, %s7, %s5
  loop: start=0, step=1, limit=4
  $region2: #{tpu_custom_call.1} parent=0 // loop_pre_header
    _
  $region3: #{tpu_custom_call.1} parent=0 // loop_header
    %s10 = sphi 0, %s14
    %p11 = scmp.ge.s32.totalorder %s10, 4
    %s20 = sphi 0, %s22
    %s23 = sphi 0, %s20
    %s24 = sphi 0, %s23
    %s40 = sphi 0, %s24
    %s44 = sphi 0, %s44
    %s46 = sphi 0, %s44
    %s47 = sphi 0, %s46
    %s61 = sphi 0, %s47
    %s65 = sphi 0, %s65
    %s67 = sphi 0, %s65
    %s68 = sphi 0, %s67
    %s82 = sphi 0, %s68
    %s86 = sphi 0, %s86
    %s88 = sphi 0, %s86
    %s89 = sphi 0, %s88
    %s103 = sphi 0, %s89
    %s109 = sphi 0, %s111
    %s112 = sphi 0, %s109
    %s113 = sphi 0, %s112
    %s129 = sphi 0, %s113
  $region4: #{tpu_custom_call.1} parent=0 // loop_header_branch
    %13 = sbr.rel (%p11) target = $region8
  $region5: #{tpu_custom_call.1} parent=0 // loop_body
    %s15 = ssub.s32 %s10, 1
    %s16 = ssub.s32 %s10, 2
    %s17 = sadd.s32 %s10, 1
    %s18 = ssub.s32 %s10, %s17
    %p19 = scmp.eq.s32.totalorder %s18, 0
    %s21 = sadd.s32 %s20, 1
    %s22 = scalar_select %p19, %s20, %s21
    %p25 = pneg %p19
    %p26 = scmp.eq.s32.totalorder %s10, 1
    %p27 = por %p25, %p26
    %p28 = scmp.ne.s32.totalorder %s20, %s23
    %p29 = scmp.eq.s32.totalorder %s10, 0
    %p30 = por %p28, %p29
    %p31 = scmp.ne.s32.totalorder %s20, %s23
    %p32 = scmp.eq.s32.totalorder %s15, 1
    %p33 = por %p31, %p32
    %p34 = scmp.ne.s32.totalorder %s23, %s24
    %p35 = scmp.eq.s32.totalorder %s15, 0
    %p36 = por %p34, %p35
    %p37 = scmp.ne.s32.totalorder %s23, %s24
    %p38 = scmp.eq.s32.totalorder %s16, 1
    %p39 = por %p37, %p38
    %p41 = scmp.ne.s32.totalorder %s24, %s40
    %p42 = scmp.eq.s32.totalorder %s16, 0
    %p43 = por %p41, %p42
    %s45 = sadd.s32 %s44, 1
    %p48 = scmp.eq.s32.totalorder %s10, 1
    %p49 = scmp.ne.s32.totalorder %s44, %s46
    %p50 = scmp.eq.s32.totalorder %s10, 0
    %p51 = por %p49, %p50
    %p52 = scmp.ne.s32.totalorder %s44, %s46
    %p53 = scmp.eq.s32.totalorder %s15, 1
    %p54 = por %p52, %p53
    %p55 = scmp.ne.s32.totalorder %s46, %s47
    %p56 = scmp.eq.s32.totalorder %s15, 0
    %p57 = por %p55, %p56
    %p58 = scmp.ne.s32.totalorder %s46, %s47
    %p59 = scmp.eq.s32.totalorder %s16, 1
    %p60 = por %p58, %p59
    %p62 = scmp.ne.s32.totalorder %s47, %s61
    %p63 = scmp.eq.s32.totalorder %s16, 0
    %p64 = por %p62, %p63
    %s66 = sadd.s32 %s65, 1
    %p69 = scmp.eq.s32.totalorder %s10, 1
    %p70 = scmp.ne.s32.totalorder %s65, %s67
    %p71 = scmp.eq.s32.totalorder %s10, 0
    %p72 = por %p70, %p71
    %p73 = scmp.ne.s32.totalorder %s65, %s67
    %p74 = scmp.eq.s32.totalorder %s15, 1
    %p75 = por %p73, %p74
    %p76 = scmp.ne.s32.totalorder %s67, %s68
    %p77 = scmp.eq.s32.totalorder %s15, 0
    %p78 = por %p76, %p77
    %p79 = scmp.ne.s32.totalorder %s67, %s68
    %p80 = scmp.eq.s32.totalorder %s16, 1
    %p81 = por %p79, %p80
    %p83 = scmp.ne.s32.totalorder %s68, %s82
    %p84 = scmp.eq.s32.totalorder %s16, 0
    %p85 = por %p83, %p84
    %s87 = sadd.s32 %s86, 1
    %p90 = scmp.eq.s32.totalorder %s10, 1
    %p91 = scmp.ne.s32.totalorder %s86, %s88
    %p92 = scmp.eq.s32.totalorder %s10, 0
    %p93 = por %p91, %p92
    %p94 = scmp.ne.s32.totalorder %s86, %s88
    %p95 = scmp.eq.s32.totalorder %s15, 1
    %p96 = por %p94, %p95
    %p97 = scmp.ne.s32.totalorder %s88, %s89
    %p98 = scmp.eq.s32.totalorder %s15, 0
    %p99 = por %p97, %p98
    %p100 = scmp.ne.s32.totalorder %s88, %s89
    %p101 = scmp.eq.s32.totalorder %s16, 1
    %p102 = por %p100, %p101
    %p104 = scmp.ne.s32.totalorder %s89, %s103
    %p105 = scmp.eq.s32.totalorder %s16, 0
    %p106 = por %p104, %p105
    %s107 = ssub.s32 %s10, %s17
    %p108 = scmp.eq.s32.totalorder %s107, 0
    %s110 = sadd.s32 %s109, 1
    %s111 = scalar_select %p108, %s109, %s110
    %p114 = pneg %p108
    %p115 = scmp.eq.s32.totalorder %s10, 1
    %p116 = por %p114, %p115
    %p117 = scmp.ne.s32.totalorder %s109, %s112
    %p118 = scmp.eq.s32.totalorder %s10, 0
    %p119 = por %p117, %p118
    %p120 = scmp.ne.s32.totalorder %s109, %s112
    %p121 = scmp.eq.s32.totalorder %s15, 1
    %p122 = por %p120, %p121
    %p123 = scmp.ne.s32.totalorder %s112, %s113
    %p124 = scmp.eq.s32.totalorder %s15, 0
    %p125 = por %p123, %p124
    %p126 = scmp.ne.s32.totalorder %s112, %s113
    %p127 = scmp.eq.s32.totalorder %s16, 1
    %p128 = por %p126, %p127
    %p130 = scmp.ne.s32.totalorder %s113, %s129
    %p131 = scmp.eq.s32.totalorder %s16, 0
    %p132 = por %p130, %p131
    %p133 = scmp.le.s32.totalorder 1, %s10
    %p134 = scmp.lt.s32.totalorder %s10, 3
    %p135 = pnand %p133, %p134
    %p136 = pneg %p135
    // Predicated region
    $region9: #{tpu_custom_call.1} parent=5 // pred_check
      _
    $region10: #{tpu_custom_call.1} parent=5 // pred_check_branch
      %138 = sbr.rel (%p135) target = $region12
    $region11: #{tpu_custom_call.1} parent=5 // pred_region
      %s139 = ssub.s32 %s10, 1
      // Predicated region
      $region13: #{tpu_custom_call.1} parent=11 // pred_check
        %p140 = pneg %p57
      $region14: #{tpu_custom_call.1} parent=11 // pred_check_branch
        %142 = sbr.rel (%p140) target = $region16
      $region15: #{tpu_custom_call.1} parent=11 // pred_region
        _
      $region16: #{tpu_custom_call.1} parent=11 // pred_fallthru
        _
      // Predicated region
      $region17: #{tpu_custom_call.1} parent=11 // pred_check
        %p143 = pneg %p78
      $region18: #{tpu_custom_call.1} parent=11 // pred_check_branch
        %145 = sbr.rel (%p143) target = $region20
      $region19: #{tpu_custom_call.1} parent=11 // pred_region
        _
      $region20: #{tpu_custom_call.1} parent=11 // pred_fallthru
        _
      // Predicated region
      $region21: #{tpu_custom_call.1} parent=11 // pred_check
        %p146 = pneg %p99
      $region22: #{tpu_custom_call.1} parent=11 // pred_check_branch
        %148 = sbr.rel (%p146) target = $region24
      $region23: #{tpu_custom_call.1} parent=11 // pred_region
        _
      $region24: #{tpu_custom_call.1} parent=11 // pred_fallthru
        _
    $region12: #{tpu_custom_call.1} parent=5 // pred_fallthru
      _
    %p149 = scmp.lt.s32.totalorder %s10, 2
    // Predicated region
    $region25: #{tpu_custom_call.1} parent=5 // pred_check
      %p150 = pneg %p149
    $region26: #{tpu_custom_call.1} parent=5 // pred_check_branch
      %152 = sbr.rel (%p150) target = $region28
    $region27: #{tpu_custom_call.1} parent=5 // pred_region
      // Predicated region
      $region29: #{tpu_custom_call.1} parent=27 // pred_check
        %p153 = pneg %p30
      $region30: #{tpu_custom_call.1} parent=27 // pred_check_branch
        %155 = sbr.rel (%p153) target = $region32
      $region31: #{tpu_custom_call.1} parent=27 // pred_region
        %s156 = smul.u32 32, %s10
        %p157 = scmp.lt.s32.totalorder %s156, 63
        %s158 = scalar_select %p157, %s156, 63
        %s159 = smul.addr %s158, 8
        %s160 = scalar_lea.vmem %s0, %s159
        %s161 = smul.u32 32, %s10
      $region32: #{tpu_custom_call.1} parent=27 // pred_fallthru
        _
    $region28: #{tpu_custom_call.1} parent=5 // pred_fallthru
      _
    %p162 = scmp.le.s32.totalorder 1, %s10
    %p163 = scmp.lt.s32.totalorder %s10, 3
    %p164 = pnand %p162, %p163
    %p165 = pneg %p164
    // Predicated region
    $region33: #{tpu_custom_call.1} parent=5 // pred_check
      _
    $region34: #{tpu_custom_call.1} parent=5 // pred_check_branch
      %167 = sbr.rel (%p164) target = $region36
    $region35: #{tpu_custom_call.1} parent=5 // pred_region
      %s168 = ssub.s32 %s10, 1
      %s169 = smul.u32 32, %s15
      %p170 = scmp.lt.s32.totalorder %s169, 63
      %s171 = scalar_select %p170, %s169, 63
      %s172 = smul.addr %s171, 8
      %s173 = scalar_lea.vmem %s0, %s172
      %p174 = pneg %p36
      %p175 = pneg %p33
      %p176 = pneg %p57
      %p177 = pneg %p54
      %p178 = pneg %p78
      %p179 = pneg %p75
      %p180 = pneg %p99
      %p181 = pneg %p96
      %p182 = pneg %p125
      %p183 = pneg %p122
      %s184 = smul.u32 32, %s15
      %p185 = scmp.lt.s32.totalorder %s184, 63
      %s186 = scalar_select %p185, %s184, 63
      %s187 = smul.addr %s186, 8
      %s188 = scalar_lea.vmem %s4, %s187
      %s189 = smul.u32 32, %s15
      %p190 = scmp.lt.s32.totalorder %s189, 63
      %s191 = scalar_select %p190, %s189, 63
      %s192 = smul.addr %s191, 8
      %s193 = scalar_lea.vmem %s0, %s192
      %s194 = smul.u32 32, %s15
      %s195 = smul.u32 32, %s15
      %p196 = scmp.lt.s32.totalorder %s195, 63
      %s197 = scalar_select %p196, %s195, 63
      %s198 = smul.addr %s197, 8
      %s199 = scalar_lea.vmem %s4, %s198
      %s200 = smul.u32 32, %s15
      %v201 = vld [vmem:[%s193] sm:$0xff]
      %v202 = vld [vmem:[%s193 + $0x8] sm:$0xff]
      %v203 = vld [vmem:[%s193 + $0x10] sm:$0xff]
      %v204 = vld [vmem:[%s193 + $0x18] sm:$0xff]
      %v205 = vld [vmem:[%s193 + $0x20] sm:$0xff]
      %v206 = vld [vmem:[%s193 + $0x28] sm:$0xff]
      %v207 = vld [vmem:[%s193 + $0x30] sm:$0xff]
      %v208 = vld [vmem:[%s193 + $0x38] sm:$0xff]
      %v209 = vld [vmem:[%s193 + $0x40] sm:$0xff]
      %v210 = vld [vmem:[%s193 + $0x48] sm:$0xff]
      %v211 = vld [vmem:[%s193 + $0x50] sm:$0xff]
      %v212 = vld [vmem:[%s193 + $0x58] sm:$0xff]
      %v213 = vld [vmem:[%s193 + $0x60] sm:$0xff]
      %v214 = vld [vmem:[%s193 + $0x68] sm:$0xff]
      %v215 = vld [vmem:[%s193 + $0x70] sm:$0xff]
      %v216 = vld [vmem:[%s193 + $0x78] sm:$0xff]
      %v217 = vld [vmem:[%s193 + $0x80] sm:$0xff]
      %v218 = vld [vmem:[%s193 + $0x88] sm:$0xff]
      %v219 = vld [vmem:[%s193 + $0x90] sm:$0xff]
      %v220 = vld [vmem:[%s193 + $0x98] sm:$0xff]
      %v221 = vld [vmem:[%s193 + $0xa0] sm:$0xff]
      %v222 = vld [vmem:[%s193 + $0xa8] sm:$0xff]
      %v223 = vld [vmem:[%s193 + $0xb0] sm:$0xff]
      %v224 = vld [vmem:[%s193 + $0xb8] sm:$0xff]
      %v225 = vld [vmem:[%s193 + $0xc0] sm:$0xff]
      %v226 = vld [vmem:[%s193 + $0xc8] sm:$0xff]
      %v227 = vld [vmem:[%s193 + $0xd0] sm:$0xff]
      %v228 = vld [vmem:[%s193 + $0xd8] sm:$0xff]
      %v229 = vld [vmem:[%s193 + $0xe0] sm:$0xff]
      %v230 = vld [vmem:[%s193 + $0xe8] sm:$0xff]
      %v231 = vld [vmem:[%s193 + $0xf0] sm:$0xff]
      %v232 = vld [vmem:[%s193 + $0xf8] sm:$0xff]
      %v233 = vld [vmem:[%s1] sm:$0xff]
      %v234 = vld [vmem:[%s1 + $0x8] sm:$0xff]
      %vm235 = vcmask 130048
      %v237 = vsel %vm235, %v201, 0
      %v240 = vsel %vm235, %v202, 0
      %v243 = vsel %vm235, %v203, 0
      %v246 = vsel %vm235, %v204, 0
      %v249 = vsel %vm235, %v205, 0
      %v252 = vsel %vm235, %v206, 0
      %v255 = vsel %vm235, %v207, 0
      %v258 = vsel %vm235, %v208, 0
      %v261 = vsel %vm235, %v209, 0
      %v264 = vsel %vm235, %v210, 0
      %v267 = vsel %vm235, %v211, 0
      %v270 = vsel %vm235, %v212, 0
      %v273 = vsel %vm235, %v213, 0
      %v276 = vsel %vm235, %v214, 0
      %v279 = vsel %vm235, %v215, 0
      %v282 = vsel %vm235, %v216, 0
      %v285 = vsel %vm235, %v217, 0
      %v288 = vsel %vm235, %v218, 0
      %v291 = vsel %vm235, %v219, 0
      %v294 = vsel %vm235, %v220, 0
      %v297 = vsel %vm235, %v221, 0
      %v300 = vsel %vm235, %v222, 0
      %v303 = vsel %vm235, %v223, 0
      %v306 = vsel %vm235, %v224, 0
      %v309 = vsel %vm235, %v225, 0
      %v312 = vsel %vm235, %v226, 0
      %v315 = vsel %vm235, %v227, 0
      %v318 = vsel %vm235, %v228, 0
      %v321 = vsel %vm235, %v229, 0
      %v324 = vsel %vm235, %v230, 0
      %v327 = vsel %vm235, %v231, 0
      %v330 = vsel %vm235, %v232, 0
      %332 = vmatprep.subr.mxu0 0.0
      %333 = vmatpush1.msra.mxu0 %v233
      %334 = vmatprep.subr.mxu0 0.0
      %335 = vmatpush1.msra.mxu0 %v234
      %336 = vmatprep.subr.mxu0 0.0
      %337 = vmatpush1.msra.mxu0 0.0
      %338 = vmatprep.subr.mxu0 0.0
      %339 = vmatpush1.msra.mxu0 0.0
      %340 = vmatprep.subr.mxu0 0.0
      %341 = vmatpush1.msra.mxu0 0.0
      %342 = vmatprep.subr.mxu0 0.0
      %343 = vmatpush1.msra.mxu0 0.0
      %344 = vmatprep.subr.mxu0 0.0
      %345 = vmatpush1.msra.mxu0 0.0
      %346 = vmatprep.subr.mxu0 0.0
      %347 = vmatpush1.msra.mxu0 0.0
      %348 = vmatprep.subr.mxu0 0.0
      %349 = vmatpush1.msra.mxu0 0.0
      %350 = vmatprep.subr.mxu0 0.0
      %351 = vmatpush1.msra.mxu0 0.0
      %352 = vmatprep.subr.mxu0 0.0
      %353 = vmatpush1.msra.mxu0 0.0
      %354 = vmatprep.subr.mxu0 0.0
      %355 = vmatpush1.msra.mxu0 0.0
      %356 = vmatprep.subr.mxu0 0.0
      %357 = vmatpush1.msra.mxu0 0.0
      %358 = vmatprep.subr.mxu0 0.0
      %359 = vmatpush1.msra.mxu0 0.0
      %360 = vmatprep.subr.mxu0 0.0
      %361 = vmatpush1.msra.mxu0 0.0
      %362 = vmatprep.subr.mxu0 0.0
      %363 = vmatpush1.msra.mxu0 0.0
      %364 = vmatprep.subr.mxu0 0.0
      %365 = vmatpush1.msra.mxu0 0.0
      %366 = vmatprep.subr.mxu0 0.0
      %367 = vmatpush1.msra.mxu0 0.0
      %368 = vmatprep.subr.mxu0 0.0
      %369 = vmatpush1.msra.mxu0 0.0
      %370 = vmatprep.subr.mxu0 0.0
      %371 = vmatpush1.msra.mxu0 0.0
      %372 = vmatprep.subr.mxu0 0.0
      %373 = vmatpush1.msra.mxu0 0.0
      %374 = vmatprep.subr.mxu0 0.0
      %375 = vmatpush1.msra.mxu0 0.0
      %376 = vmatprep.subr.mxu0 0.0
      %377 = vmatpush1.msra.mxu0 0.0
      %378 = vmatprep.subr.mxu0 0.0
      %379 = vmatpush1.msra.mxu0 0.0
      %380 = vmatprep.subr.mxu0 0.0
      %381 = vmatpush1.msra.mxu0 0.0
      %382 = vmatprep.subr.mxu0 0.0
      %383 = vmatpush1.msra.mxu0 0.0
      %384 = vmatprep.subr.mxu0 0.0
      %385 = vmatpush1.msra.mxu0 0.0
      %386 = vmatprep.subr.mxu0 0.0
      %387 = vmatpush1.msra.mxu0 0.0
      %388 = vmatprep.subr.mxu0 0.0
      %389 = vmatpush1.msra.mxu0 0.0
      %390 = vmatprep.subr.mxu0 0.0
      %391 = vmatpush1.msra.mxu0 0.0
      %392 = vmatprep.subr.mxu0 0.0
      %393 = vmatpush1.msra.mxu0 0.0
      %394 = vmatprep.subr.mxu0 0.0
      %395 = vmatpush1.msra.mxu0 0.0
      %396 = vmatprep.mubr.f32.mxu0 0.0
      %397 = vmatmul.mubr.f32.gmra.mrb[0].mxu0 %v237
      %v398 = vpop.f32.mrb[0].mxu0
      %v399 = vadd.f32 0.0, %v398
      %v400 = vpop.f32.mrb[0].mxu0
      %401 = vmatprep.mubr.f32.mxu0 0.0
      %402 = vmatmul.mubr.f32.gmra.mrb[0].mxu0 %v240
      %v403 = vpop.f32.mrb[0].mxu0
      %v404 = vadd.f32 0.0, %v403
      %v405 = vpop.f32.mrb[0].mxu0
      %406 = vmatprep.mubr.f32.mxu0 0.0
      %407 = vmatmul.mubr.f32.gmra.mrb[0].mxu0 %v243
      %v408 = vpop.f32.mrb[0].mxu0
      %v409 = vadd.f32 0.0, %v408
      %v410 = vpop.f32.mrb[0].mxu0
      %411 = vmatprep.mubr.f32.mxu0 0.0
      %412 = vmatmul.mubr.f32.gmra.mrb[0].mxu0 %v246
      %v413 = vpop.f32.mrb[0].mxu0
      %v414 = vadd.f32 0.0, %v413
      %v415 = vpop.f32.mrb[0].mxu0
      %416 = vmatprep.mubr.f32.mxu0 0.0
      %417 = vmatmul.mubr.f32.gmra.mrb[0].mxu0 %v249
      %v418 = vpop.f32.mrb[0].mxu0
      %v419 = vadd.f32 0.0, %v418
      %v420 = vpop.f32.mrb[0].mxu0
      %421 = vmatprep.mubr.f32.mxu0 0.0
      %422 = vmatmul.mubr.f32.gmra.mrb[0].mxu0 %v252
      %v423 = vpop.f32.mrb[0].mxu0
      %v424 = vadd.f32 0.0, %v423
      %v425 = vpop.f32.mrb[0].mxu0
      %426 = vmatprep.mubr.f32.mxu0 0.0
      %427 = vmatmul.mubr.f32.gmra.mrb[0].mxu0 %v255
      %v428 = vpop.f32.mrb[0].mxu0
      %v429 = vadd.f32 0.0, %v428
      %v430 = vpop.f32.mrb[0].mxu0
      %431 = vmatprep.mubr.f32.mxu0 0.0
      %432 = vmatmul.mubr.f32.gmra.mrb[0].mxu0 %v258
      %v433 = vpop.f32.mrb[0].mxu0
      %v434 = vadd.f32 0.0, %v433
      %v435 = vpop.f32.mrb[0].mxu0
      %436 = vmatprep.mubr.f32.mxu0 0.0
      %437 = vmatmul.mubr.f32.gmra.mrb[0].mxu0 %v261
      %v438 = vpop.f32.mrb[0].mxu0
      %v439 = vadd.f32 0.0, %v438
      %v440 = vpop.f32.mrb[0].mxu0
      %441 = vmatprep.mubr.f32.mxu0 0.0
      %442 = vmatmul.mubr.f32.gmra.mrb[0].mxu0 %v264
      %v443 = vpop.f32.mrb[0].mxu0
      %v444 = vadd.f32 0.0, %v443
      %v445 = vpop.f32.mrb[0].mxu0
      %446 = vmatprep.mubr.f32.mxu0 0.0
      %447 = vmatmul.mubr.f32.gmra.mrb[0].mxu0 %v267
      %v448 = vpop.f32.mrb[0].mxu0
      %v449 = vadd.f32 0.0, %v448
      %v450 = vpop.f32.mrb[0].mxu0
      %451 = vmatprep.mubr.f32.mxu0 0.0
      %452 = vmatmul.mubr.f32.gmra.mrb[0].mxu0 %v270
      %v453 = vpop.f32.mrb[0].mxu0
      %v454 = vadd.f32 0.0, %v453
      %v455 = vpop.f32.mrb[0].mxu0
      %456 = vmatprep.mubr.f32.mxu0 0.0
      %457 = vmatmul.mubr.f32.gmra.mrb[0].mxu0 %v273
      %v458 = vpop.f32.mrb[0].mxu0
      %v459 = vadd.f32 0.0, %v458
      %v460 = vpop.f32.mrb[0].mxu0
      %461 = vmatprep.mubr.f32.mxu0 0.0
      %462 = vmatmul.mubr.f32.gmra.mrb[0].mxu0 %v276
      %v463 = vpop.f32.mrb[0].mxu0
      %v464 = vadd.f32 0.0, %v463
      %v465 = vpop.f32.mrb[0].mxu0
      %466 = vmatprep.mubr.f32.mxu0 0.0
      %467 = vmatmul.mubr.f32.gmra.mrb[0].mxu0 %v279
      %v468 = vpop.f32.mrb[0].mxu0
      %v469 = vadd.f32 0.0, %v468
      %v470 = vpop.f32.mrb[0].mxu0
      %471 = vmatprep.mubr.f32.mxu0 0.0
      %472 = vmatmul.mubr.f32.gmra.mrb[0].mxu0 %v282
      %v473 = vpop.f32.mrb[0].mxu0
      %v474 = vadd.f32 0.0, %v473
      %v475 = vpop.f32.mrb[0].mxu0
      %476 = vmatprep.mubr.f32.mxu0 0.0
      %477 = vmatmul.mubr.f32.gmra.mrb[0].mxu0 %v285
      %v478 = vpop.f32.mrb[0].mxu0
      %v479 = vadd.f32 0.0, %v478
      %v480 = vpop.f32.mrb[0].mxu0
      %481 = vmatprep.mubr.f32.mxu0 0.0
      %482 = vmatmul.mubr.f32.gmra.mrb[0].mxu0 %v288
      %v483 = vpop.f32.mrb[0].mxu0
      %v484 = vadd.f32 0.0, %v483
      %v485 = vpop.f32.mrb[0].mxu0
      %486 = vmatprep.mubr.f32.mxu0 0.0
      %487 = vmatmul.mubr.f32.gmra.mrb[0].mxu0 %v291
      %v488 = vpop.f32.mrb[0].mxu0
      %v489 = vadd.f32 0.0, %v488
      %v490 = vpop.f32.mrb[0].mxu0
      %491 = vmatprep.mubr.f32.mxu0 0.0
      %492 = vmatmul.mubr.f32.gmra.mrb[0].mxu0 %v294
      %v493 = vpop.f32.mrb[0].mxu0
      %v494 = vadd.f32 0.0, %v493
      %v495 = vpop.f32.mrb[0].mxu0
      %496 = vmatprep.mubr.f32.mxu0 0.0
      %497 = vmatmul.mubr.f32.gmra.mrb[0].mxu0 %v297
      %v498 = vpop.f32.mrb[0].mxu0
      %v499 = vadd.f32 0.0, %v498
      %v500 = vpop.f32.mrb[0].mxu0
      %501 = vmatprep.mubr.f32.mxu0 0.0
      %502 = vmatmul.mubr.f32.gmra.mrb[0].mxu0 %v300
      %v503 = vpop.f32.mrb[0].mxu0
      %v504 = vadd.f32 0.0, %v503
      %v505 = vpop.f32.mrb[0].mxu0
      %506 = vmatprep.mubr.f32.mxu0 0.0
      %507 = vmatmul.mubr.f32.gmra.mrb[0].mxu0 %v303
      %v508 = vpop.f32.mrb[0].mxu0
      %v509 = vadd.f32 0.0, %v508
      %v510 = vpop.f32.mrb[0].mxu0
      %511 = vmatprep.mubr.f32.mxu0 0.0
      %512 = vmatmul.mubr.f32.gmra.mrb[0].mxu0 %v306
      %v513 = vpop.f32.mrb[0].mxu0
      %v514 = vadd.f32 0.0, %v513
      %v515 = vpop.f32.mrb[0].mxu0
      %516 = vmatprep.mubr.f32.mxu0 0.0
      %517 = vmatmul.mubr.f32.gmra.mrb[0].mxu0 %v309
      %v518 = vpop.f32.mrb[0].mxu0
      %v519 = vadd.f32 0.0, %v518
      %v520 = vpop.f32.mrb[0].mxu0
      %521 = vmatprep.mubr.f32.mxu0 0.0
      %522 = vmatmul.mubr.f32.gmra.mrb[0].mxu0 %v312
      %v523 = vpop.f32.mrb[0].mxu0
      %v524 = vadd.f32 0.0, %v523
      %v525 = vpop.f32.mrb[0].mxu0
      %526 = vmatprep.mubr.f32.mxu0 0.0
      %527 = vmatmul.mubr.f32.gmra.mrb[0].mxu0 %v315
      %v528 = vpop.f32.mrb[0].mxu0
      %v529 = vadd.f32 0.0, %v528
      %v530 = vpop.f32.mrb[0].mxu0
      %531 = vmatprep.mubr.f32.mxu0 0.0
      %532 = vmatmul.mubr.f32.gmra.mrb[0].mxu0 %v318
      %v533 = vpop.f32.mrb[0].mxu0
      %v534 = vadd.f32 0.0, %v533
      %v535 = vpop.f32.mrb[0].mxu0
      %536 = vmatprep.mubr.f32.mxu0 0.0
      %537 = vmatmul.mubr.f32.gmra.mrb[0].mxu0 %v321
      %v538 = vpop.f32.mrb[0].mxu0
      %v539 = vadd.f32 0.0, %v538
      %v540 = vpop.f32.mrb[0].mxu0
      %541 = vmatprep.mubr.f32.mxu0 0.0
      %542 = vmatmul.mubr.f32.gmra.mrb[0].mxu0 %v324
      %v543 = vpop.f32.mrb[0].mxu0
      %v544 = vadd.f32 0.0, %v543
      %v545 = vpop.f32.mrb[0].mxu0
      %546 = vmatprep.mubr.f32.mxu0 0.0
      %547 = vmatmul.mubr.f32.gmra.mrb[0].mxu0 %v327
      %v548 = vpop.f32.mrb[0].mxu0
      %v549 = vadd.f32 0.0, %v548
      %v550 = vpop.f32.mrb[0].mxu0
      %551 = vmatprep.mubr.f32.mxu0 0.0
      %552 = vmatmul.mubr.f32.gmra.mrb[0].mxu0 %v330
      %v553 = vpop.f32.mrb[0].mxu0
      %v554 = vadd.f32 0.0, %v553
      %v555 = vpop.f32.mrb[0].mxu0
      %556 = vdwg.mxu0
      %v557 = vld [vmem:[%s2] sm:$0x1]
      %v559 = vlaneseq
      %v560 = vshrl.u32 %v559, 7
      %v561 = vsub.s32 0, %v560
      %v562 = vrot.slane %v557, %v561
      %v564 = vmul.f32 %v399, %v562
      %v565 = vmul.f32 %v404, %v562
      %v566 = vmul.f32 %v409, %v562
      %v567 = vmul.f32 %v414, %v562
      %v568 = vmul.f32 %v419, %v562
      %v569 = vmul.f32 %v424, %v562
      %v570 = vmul.f32 %v429, %v562
      %v571 = vmul.f32 %v434, %v562
      %v572 = vmul.f32 %v439, %v562
      %v573 = vmul.f32 %v444, %v562
      %v574 = vmul.f32 %v449, %v562
      %v575 = vmul.f32 %v454, %v562
      %v576 = vmul.f32 %v459, %v562
      %v577 = vmul.f32 %v464, %v562
      %v578 = vmul.f32 %v469, %v562
      %v579 = vmul.f32 %v474, %v562
      %v580 = vmul.f32 %v479, %v562
      %v581 = vmul.f32 %v484, %v562
      %v582 = vmul.f32 %v489, %v562
      %v583 = vmul.f32 %v494, %v562
      %v584 = vmul.f32 %v499, %v562
      %v585 = vmul.f32 %v504, %v562
      %v586 = vmul.f32 %v509, %v562
      %v587 = vmul.f32 %v514, %v562
      %v588 = vmul.f32 %v519, %v562
      %v589 = vmul.f32 %v524, %v562
      %v590 = vmul.f32 %v529, %v562
      %v591 = vmul.f32 %v534, %v562
      %v592 = vmul.f32 %v539, %v562
      %v593 = vmul.f32 %v544, %v562
      %v594 = vmul.f32 %v549, %v562
      %v595 = vmul.f32 %v554, %v562
      %v596 = vld [vmem:[%s3] sm:$0x1]
      %v598 = vlaneseq
      %v599 = vshrl.u32 %v598, 7
      %v600 = vsub.s32 0, %v599
      %v601 = vrot.slane %v596, %v600
      %v603 = vadd.f32 %v564, %v601
      %v604 = vadd.f32 %v565, %v601
      %v605 = vadd.f32 %v566, %v601
      %v606 = vadd.f32 %v567, %v601
      %v607 = vadd.f32 %v568, %v601
      %v608 = vadd.f32 %v569, %v601
      %v609 = vadd.f32 %v570, %v601
      %v610 = vadd.f32 %v571, %v601
      %v611 = vadd.f32 %v572, %v601
      %v612 = vadd.f32 %v573, %v601
      %v613 = vadd.f32 %v574, %v601
      %v614 = vadd.f32 %v575, %v601
      %v615 = vadd.f32 %v576, %v601
      %v616 = vadd.f32 %v577, %v601
      %v617 = vadd.f32 %v578, %v601
      %v618 = vadd.f32 %v579, %v601
      %v619 = vadd.f32 %v580, %v601
      %v620 = vadd.f32 %v581, %v601
      %v621 = vadd.f32 %v582, %v601
      %v622 = vadd.f32 %v583, %v601
      %v623 = vadd.f32 %v584, %v601
      %v624 = vadd.f32 %v585, %v601
      %v625 = vadd.f32 %v586, %v601
      %v626 = vadd.f32 %v587, %v601
      %v627 = vadd.f32 %v588, %v601
      %v628 = vadd.f32 %v589, %v601
      %v629 = vadd.f32 %v590, %v601
      %v630 = vadd.f32 %v591, %v601
      %v631 = vadd.f32 %v592, %v601
      %v632 = vadd.f32 %v593, %v601
      %v633 = vadd.f32 %v594, %v601
      %v634 = vadd.f32 %v595, %v601
      %v635 = vsub.f32 0.0, %v603
      %v636 = vsub.f32 0.0, %v604
      %v637 = vsub.f32 0.0, %v605
      %v638 = vsub.f32 0.0, %v606
      %v639 = vsub.f32 0.0, %v607
      %v640 = vsub.f32 0.0, %v608
      %v641 = vsub.f32 0.0, %v609
      %v642 = vsub.f32 0.0, %v610
      %v643 = vsub.f32 0.0, %v611
      %v644 = vsub.f32 0.0, %v612
      %v645 = vsub.f32 0.0, %v613
      %v646 = vsub.f32 0.0, %v614
      %v647 = vsub.f32 0.0, %v615
      %v648 = vsub.f32 0.0, %v616
      %v649 = vsub.f32 0.0, %v617
      %v650 = vsub.f32 0.0, %v618
      %v651 = vsub.f32 0.0, %v619
      %v652 = vsub.f32 0.0, %v620
      %v653 = vsub.f32 0.0, %v621
      %v654 = vsub.f32 0.0, %v622
      %v655 = vsub.f32 0.0, %v623
      %v656 = vsub.f32 0.0, %v624
      %v657 = vsub.f32 0.0, %v625
      %v658 = vsub.f32 0.0, %v626
      %v659 = vsub.f32 0.0, %v627
      %v660 = vsub.f32 0.0, %v628
      %v661 = vsub.f32 0.0, %v629
      %v662 = vsub.f32 0.0, %v630
      %v663 = vsub.f32 0.0, %v631
      %v664 = vsub.f32 0.0, %v632
      %v665 = vsub.f32 0.0, %v633
      %v666 = vsub.f32 0.0, %v634
      %v667 = vmul.f32 %v635, 1.442695
      %v668 = vpow.pop %v667
      %v669 = vmul.f32 %v636, 1.442695
      %v670 = vpow.pop %v669
      %v671 = vmul.f32 %v637, 1.442695
      %v672 = vpow.pop %v671
      %v673 = vmul.f32 %v638, 1.442695
      %v674 = vpow.pop %v673
      %v675 = vmul.f32 %v639, 1.442695
      %v676 = vpow.pop %v675
      %v677 = vmul.f32 %v640, 1.442695
      %v678 = vpow.pop %v677
      %v679 = vmul.f32 %v641, 1.442695
      %v680 = vpow.pop %v679
      %v681 = vmul.f32 %v642, 1.442695
      %v682 = vpow.pop %v681
      %v683 = vmul.f32 %v643, 1.442695
      %v684 = vpow.pop %v683
      %v685 = vmul.f32 %v644, 1.442695
      %v686 = vpow.pop %v685
      %v687 = vmul.f32 %v645, 1.442695
      %v688 = vpow.pop %v687
      %v689 = vmul.f32 %v646, 1.442695
      %v690 = vpow.pop %v689
      %v691 = vmul.f32 %v647, 1.442695
      %v692 = vpow.pop %v691
      %v693 = vmul.f32 %v648, 1.442695
      %v694 = vpow.pop %v693
      %v695 = vmul.f32 %v649, 1.442695
      %v696 = vpow.pop %v695
      %v697 = vmul.f32 %v650, 1.442695
      %v698 = vpow.pop %v697
      %v699 = vmul.f32 %v651, 1.442695
      %v700 = vpow.pop %v699
      %v701 = vmul.f32 %v652, 1.442695
      %v702 = vpow.pop %v701
      %v703 = vmul.f32 %v653, 1.442695
      %v704 = vpow.pop %v703
      %v705 = vmul.f32 %v654, 1.442695
      %v706 = vpow.pop %v705
      %v707 = vmul.f32 %v655, 1.442695
      %v708 = vpow.pop %v707
      %v709 = vmul.f32 %v656, 1.442695
      %v710 = vpow.pop %v709
      %v711 = vmul.f32 %v657, 1.442695
      %v712 = vpow.pop %v711
      %v713 = vmul.f32 %v658, 1.442695
      %v714 = vpow.pop %v713
      %v715 = vmul.f32 %v659, 1.442695
      %v716 = vpow.pop %v715
      %v717 = vmul.f32 %v660, 1.442695
      %v718 = vpow.pop %v717
      %v719 = vmul.f32 %v661, 1.442695
      %v720 = vpow.pop %v719
      %v721 = vmul.f32 %v662, 1.442695
      %v722 = vpow.pop %v721
      %v723 = vmul.f32 %v663, 1.442695
      %v724 = vpow.pop %v723
      %v725 = vmul.f32 %v664, 1.442695
      %v726 = vpow.pop %v725
      %v727 = vmul.f32 %v665, 1.442695
      %v728 = vpow.pop %v727
      %v729 = vmul.f32 %v666, 1.442695
      %v730 = vpow.pop %v729
      %v731 = vadd.f32 %v668, 1.0
      %v732 = vadd.f32 %v670, 1.0
      %v733 = vadd.f32 %v672, 1.0
      %v734 = vadd.f32 %v674, 1.0
      %v735 = vadd.f32 %v676, 1.0
      %v736 = vadd.f32 %v678, 1.0
      %v737 = vadd.f32 %v680, 1.0
      %v738 = vadd.f32 %v682, 1.0
      %v739 = vadd.f32 %v684, 1.0
      %v740 = vadd.f32 %v686, 1.0
      %v741 = vadd.f32 %v688, 1.0
      %v742 = vadd.f32 %v690, 1.0
      %v743 = vadd.f32 %v692, 1.0
      %v744 = vadd.f32 %v694, 1.0
      %v745 = vadd.f32 %v696, 1.0
      %v746 = vadd.f32 %v698, 1.0
      %v747 = vadd.f32 %v700, 1.0
      %v748 = vadd.f32 %v702, 1.0
      %v749 = vadd.f32 %v704, 1.0
      %v750 = vadd.f32 %v706, 1.0
      %v751 = vadd.f32 %v708, 1.0
      %v752 = vadd.f32 %v710, 1.0
      %v753 = vadd.f32 %v712, 1.0
      %v754 = vadd.f32 %v714, 1.0
      %v755 = vadd.f32 %v716, 1.0
      %v756 = vadd.f32 %v718, 1.0
      %v757 = vadd.f32 %v720, 1.0
      %v758 = vadd.f32 %v722, 1.0
      %v759 = vadd.f32 %v724, 1.0
      %v760 = vadd.f32 %v726, 1.0
      %v761 = vadd.f32 %v728, 1.0
      %v762 = vadd.f32 %v730, 1.0
      %v763 = vrcp.pop %v731
      %v764 = vrcp.pop %v732
      %v765 = vrcp.pop %v733
      %v766 = vrcp.pop %v734
      %v767 = vrcp.pop %v735
      %v768 = vrcp.pop %v736
      %v769 = vrcp.pop %v737
      %v770 = vrcp.pop %v738
      %v771 = vrcp.pop %v739
      %v772 = vrcp.pop %v740
      %v773 = vrcp.pop %v741
      %v774 = vrcp.pop %v742
      %v775 = vrcp.pop %v743
      %v776 = vrcp.pop %v744
      %v777 = vrcp.pop %v745
      %v778 = vrcp.pop %v746
      %v779 = vrcp.pop %v747
      %v780 = vrcp.pop %v748
      %v781 = vrcp.pop %v749
      %v782 = vrcp.pop %v750
      %v783 = vrcp.pop %v751
      %v784 = vrcp.pop %v752
      %v785 = vrcp.pop %v753
      %v786 = vrcp.pop %v754
      %v787 = vrcp.pop %v755
      %v788 = vrcp.pop %v756
      %v789 = vrcp.pop %v757
      %v790 = vrcp.pop %v758
      %v791 = vrcp.pop %v759
      %v792 = vrcp.pop %v760
      %v793 = vrcp.pop %v761
      %v794 = vrcp.pop %v762
      %v795 = vmul.f32 %v603, %v763
      %v796 = vmul.f32 %v604, %v764
      %v797 = vmul.f32 %v605, %v765
      %v798 = vmul.f32 %v606, %v766
      %v799 = vmul.f32 %v607, %v767
      %v800 = vmul.f32 %v608, %v768
      %v801 = vmul.f32 %v609, %v769
      %v802 = vmul.f32 %v610, %v770
      %v803 = vmul.f32 %v611, %v771
      %v804 = vmul.f32 %v612, %v772
      %v805 = vmul.f32 %v613, %v773
      %v806 = vmul.f32 %v614, %v774
      %v807 = vmul.f32 %v615, %v775
      %v808 = vmul.f32 %v616, %v776
      %v809 = vmul.f32 %v617, %v777
      %v810 = vmul.f32 %v618, %v778
      %v811 = vmul.f32 %v619, %v779
      %v812 = vmul.f32 %v620, %v780
      %v813 = vmul.f32 %v621, %v781
      %v814 = vmul.f32 %v622, %v782
      %v815 = vmul.f32 %v623, %v783
      %v816 = vmul.f32 %v624, %v784
      %v817 = vmul.f32 %v625, %v785
      %v818 = vmul.f32 %v626, %v786
      %v819 = vmul.f32 %v627, %v787
      %v820 = vmul.f32 %v628, %v788
      %v821 = vmul.f32 %v629, %v789
      %v822 = vmul.f32 %v630, %v790
      %v823 = vmul.f32 %v631, %v791
      %v824 = vmul.f32 %v632, %v792
      %v825 = vmul.f32 %v633, %v793
      %v826 = vmul.f32 %v634, %v794
      %vm827 = vcmask 64512
      %828 = vst.msk [vmem:[%s199] sm:$0xff] %vm827, %v795
      %829 = vst.msk [vmem:[%s199 + $0x8] sm:$0xff] %vm827, %v796
      %830 = vst.msk [vmem:[%s199 + $0x10] sm:$0xff] %vm827, %v797
      %831 = vst.msk [vmem:[%s199 + $0x18] sm:$0xff] %vm827, %v798
      %832 = vst.msk [vmem:[%s199 + $0x20] sm:$0xff] %vm827, %v799
      %833 = vst.msk [vmem:[%s199 + $0x28] sm:$0xff] %vm827, %v800
      %834 = vst.msk [vmem:[%s199 + $0x30] sm:$0xff] %vm827, %v801
      %835 = vst.msk [vmem:[%s199 + $0x38] sm:$0xff] %vm827, %v802
      %836 = vst.msk [vmem:[%s199 + $0x40] sm:$0xff] %vm827, %v803
      %837 = vst.msk [vmem:[%s199 + $0x48] sm:$0xff] %vm827, %v804
      %838 = vst.msk [vmem:[%s199 + $0x50] sm:$0xff] %vm827, %v805
      %839 = vst.msk [vmem:[%s199 + $0x58] sm:$0xff] %vm827, %v806
      %840 = vst.msk [vmem:[%s199 + $0x60] sm:$0xff] %vm827, %v807
      %841 = vst.msk [vmem:[%s199 + $0x68] sm:$0xff] %vm827, %v808
      %842 = vst.msk [vmem:[%s199 + $0x70] sm:$0xff] %vm827, %v809
      %843 = vst.msk [vmem:[%s199 + $0x78] sm:$0xff] %vm827, %v810
      %844 = vst.msk [vmem:[%s199 + $0x80] sm:$0xff] %vm827, %v811
      %845 = vst.msk [vmem:[%s199 + $0x88] sm:$0xff] %vm827, %v812
      %846 = vst.msk [vmem:[%s199 + $0x90] sm:$0xff] %vm827, %v813
      %847 = vst.msk [vmem:[%s199 + $0x98] sm:$0xff] %vm827, %v814
      %848 = vst.msk [vmem:[%s199 + $0xa0] sm:$0xff] %vm827, %v815
      %849 = vst.msk [vmem:[%s199 + $0xa8] sm:$0xff] %vm827, %v816
      %850 = vst.msk [vmem:[%s199 + $0xb0] sm:$0xff] %vm827, %v817
      %851 = vst.msk [vmem:[%s199 + $0xb8] sm:$0xff] %vm827, %v818
      %852 = vst.msk [vmem:[%s199 + $0xc0] sm:$0xff] %vm827, %v819
      %853 = vst.msk [vmem:[%s199 + $0xc8] sm:$0xff] %vm827, %v820
      %854 = vst.msk [vmem:[%s199 + $0xd0] sm:$0xff] %vm827, %v821
      %855 = vst.msk [vmem:[%s199 + $0xd8] sm:$0xff] %vm827, %v822
      %856 = vst.msk [vmem:[%s199 + $0xe0] sm:$0xff] %vm827, %v823
      %857 = vst.msk [vmem:[%s199 + $0xe8] sm:$0xff] %vm827, %v824
      %858 = vst.msk [vmem:[%s199 + $0xf0] sm:$0xff] %vm827, %v825
      %859 = vst.msk [vmem:[%s199 + $0xf8] sm:$0xff] %vm827, %v826
      %s860 = smul.u32 32, %s15
      %p861 = scmp.lt.s32.totalorder %s860, 63
      %s862 = scalar_select %p861, %s860, 63
      %s863 = smul.addr %s862, 8
      %s864 = scalar_lea.vmem %s4, %s863
      // Predicated region
      $region37: #{tpu_custom_call.1} parent=35 // pred_check
        %p865 = pneg %p122
      $region38: #{tpu_custom_call.1} parent=35 // pred_check_branch
        %867 = sbr.rel (%p865) target = $region40
      $region39: #{tpu_custom_call.1} parent=35 // pred_region
        %s868 = smul.u32 32, %s15
      $region40: #{tpu_custom_call.1} parent=35 // pred_fallthru
        _
    $region36: #{tpu_custom_call.1} parent=5 // pred_fallthru
      _
    %p869 = scmp.le.s32.totalorder 2, %s10
    // Predicated region
    $region41: #{tpu_custom_call.1} parent=5 // pred_check
      %p870 = pneg %p869
    $region42: #{tpu_custom_call.1} parent=5 // pred_check_branch
      %872 = sbr.rel (%p870) target = $region44
    $region43: #{tpu_custom_call.1} parent=5 // pred_region
      %s873 = ssub.s32 %s10, 2
      // Predicated region
      $region45: #{tpu_custom_call.1} parent=43 // pred_check
        %p874 = pneg %p128
      $region46: #{tpu_custom_call.1} parent=43 // pred_check_branch
        %876 = sbr.rel (%p874) target = $region48
      $region47: #{tpu_custom_call.1} parent=43 // pred_region
        %s877 = smul.u32 32, %s16
        %p878 = scmp.lt.s32.totalorder %s877, 63
        %s879 = scalar_select %p878, %s877, 63
        %s880 = smul.addr %s879, 8
        %s881 = scalar_lea.vmem %s4, %s880
      $region48: #{tpu_custom_call.1} parent=43 // pred_fallthru
        _
    $region44: #{tpu_custom_call.1} parent=5 // pred_fallthru
      _
  $region6: #{tpu_custom_call.1} parent=0 // loop_footer
    %s14 = sadd.s32 1, %s10
  $region7: #{tpu_custom_call.1} parent=0 // loop_footer_branch
    %9 = sbr.rel target = $region3
  $region8: #{tpu_custom_call.1} parent=0 // loop_exit
    _

</llo_original>
